<compile_context>
chip_gen: v5e
topology: v5e:2x2
jax: 0.10.0
libtpu: 0.0.40
codegen_flags: <defaults>
</compile_context>

<pallas_src>
import jax
import jax.numpy as jnp
from jax.experimental import pallas as pl
from jax.experimental.pallas import tpu as pltpu


def _round_up(x, m):
    return ((x + m - 1) // m) * m


def _angle_resnet_kernel(a_ref, w1_ref, b1_ref, w2_ref, b2_ref, o_ref):
    # Residual kept in f32 in-kernel (f32 VPU path works on all generations).
    a = a_ref[...].astype(jnp.float32)
    h = jnp.maximum(a, 0.0).astype(w1_ref.dtype)                    # relu
    h = jnp.dot(h, w1_ref[...],
                preferred_element_type=jnp.float32) + b1_ref[...]   # linear_1
    h = jnp.maximum(h, 0.0).astype(w2_ref.dtype)                    # relu
    h = jnp.dot(h, w2_ref[...],
                preferred_element_type=jnp.float32) + b2_ref[...]   # linear_2
    o_ref[...] = (h + a).astype(o_ref.dtype)                        # residual


def pack_angle_resnet_params(w1, b1, w2, b2, *, lanes=128,
                             compute_dtype=jnp.bfloat16):
    """One-time weight/bias preparation (keep out of the per-call hot path).

    w1, w2 : (C, C) weights in (in, out) layout (PyTorch `weight.T`).
    b1, b2 : (C,) biases.
    lanes  : lane width to pack to.  128 is native everywhere; 256 fills the
             256x256 MXU on v6e/v7x (do not use 256 on v5e's 128-wide MXUs).

    When C < lanes and C divides lanes, `pack = lanes // C` activation rows
    are folded into one lane-dense row; weights become (lanes, lanes)
    block-diagonal kron(I_pack, W) and biases are tiled.  This turns masked
    partial stores / narrow MXU passes into full lane-dense tiles.
    """
    C = w1.shape[0]
    pack = lanes // C if (C < lanes and lanes % C == 0) else 1
    # TODO(synk): C not dividing `lanes` (e.g. 48, 96) falls back to pack=1
    # with sub-128-lane tiles -> correct but slow (masked partial stores).
    if pack > 1:
        eye = jnp.eye(pack, dtype=w1.dtype)
        w1p, w2p = jnp.kron(eye, w1), jnp.kron(eye, w2)
        b1p, b2p = jnp.tile(b1, pack), jnp.tile(b2, pack)
    else:
        w1p, w2p, b1p, b2p = w1, w2, b1, b2
    Cp = C * pack
    return dict(
        w1=w1p.astype(compute_dtype),
        w2=w2p.astype(compute_dtype),
        b1=b1p.astype(jnp.float32).reshape(1, Cp),
        b2=b2p.astype(jnp.float32).reshape(1, Cp),
        C=C, pack=pack, Cp=Cp,
    )


def angle_resnet_block(a, params, *, tm=4096, out_dtype=None):
    """AngleResnetBlock forward.

    a       : (..., C) activations (channels-last), any float dtype.
    params  : output of pack_angle_resnet_params (pre-packed weights/biases).
    tm      : row-tile size over the lane-packed activation matrix
              (sweep 2048-8192; default 4096 keeps ~12-15 MiB/step in VMEM).
    out_dtype : output dtype; defaults to the compute dtype when the compute
              path is narrower than the input (cuts writeback traffic 2x).
              Pass jnp.float32 to keep a full-precision residual store.
    """
    C, pack, Cp = params["C"], params["pack"], params["Cp"]
    w1, b1, w2, b2 = params["w1"], params["b1"], params["w2"], params["b2"]
    compute_dtype = w1.dtype

    orig_shape = a.shape
    assert orig_shape[-1] == C, "last dim of `a` must equal c_hidden"
    if out_dtype is None:
        out_dtype = a.dtype if a.dtype == compute_dtype else compute_dtype

    a2 = a.reshape(-1, C)
    N = a2.shape[0]

    # Lane-dense packing is a pure (layout-preserving) reshape.  Pad rows only
    # up to a multiple of 8*pack (sublane granularity after packing); the
    # last grid tile is allowed to be ragged -- no padding up to tm.
    n_target = _round_up(max(N, 1), 8 * pack)
    if n_target != N:
        a2 = jnp.pad(a2, ((0, n_target - N), (0, 0)))
    Np = n_target // pack
    a2 = a2.reshape(Np, Cp)

    tm = max(8, _round_up(min(tm, Np), 8))
    grid = (pl.cdiv(Np, tm),)

    out = pl.pallas_call(
        _angle_resnet_kernel,
        out_shape=jax.ShapeDtypeStruct((Np, Cp), out_dtype),
        grid_spec=pltpu.PrefetchScalarGridSpec(
            num_scalar_prefetch=0,
            grid=grid,
            in_specs=[
                pl.BlockSpec((tm, Cp), lambda i: (i, 0)),  # activations (tiled)
                # Constant index_map -> the pipeline keeps these resident and
                # does not re-DMA them per grid step.
                pl.BlockSpec((Cp, Cp), lambda i: (0, 0)),  # w1
                pl.BlockSpec((1, Cp), lambda i: (0, 0)),   # b1
                pl.BlockSpec((Cp, Cp), lambda i: (0, 0)),  # w2
                pl.BlockSpec((1, Cp), lambda i: (0, 0)),   # b2
            ],
            out_specs=pl.BlockSpec((tm, Cp), lambda i: (i, 0)),
        ),
        compiler_params=pltpu.CompilerParams(
            # Independent row tiles -> shard across v7x's 2 TensorCores.
            dimension_semantics=("parallel",),
            # Raise v5e's 16 MiB scoped default; matches v6e/v7x defaults and
            # fits physical VMEM on every generation.
            vmem_limit_bytes=32 * 1024 * 1024,
        ),
    )(a2, w1, b1, w2, b2)

    # Unpack lanes and strip the (tiny) row padding.
    out = out.reshape(Np * pack, C)[:N]
    return out.reshape(orig_shape)


def _reference(a, w1, b1, w2, b2):
    h = jnp.maximum(a, 0.0)
    h = h @ w1 + b1
    h = jnp.maximum(h, 0.0)
    h = h @ w2 + b2
    return h + a


if __name__ == "__main__":
    key = jax.random.PRNGKey(0)
    c_hidden = 32
    batch, seq = 2, 8                       # a: (2, 8, 32) -> 16 rows of 32

    k_a, k_w1, k_b1, k_w2, k_b2 = jax.random.split(key, 5)
    a = jax.random.normal(k_a, (batch, seq, c_hidden), dtype=jnp.float32)

    # nn.Linear-style init: weight (out, in), bias (out,)
    bound = 1.0 / (c_hidden ** 0.5)
    w1_t = jax.random.uniform(k_w1, (c_hidden, c_hidden), jnp.float32, -bound, bound)
    b1 = jax.random.uniform(k_b1, (c_hidden,), jnp.float32, -bound, bound)
    w2_t = jax.random.uniform(k_w2, (c_hidden, c_hidden), jnp.float32, -bound, bound)
    b2 = jax.random.uniform(k_b2, (c_hidden,), jnp.float32, -bound, bound)
    w1, w2 = w1_t.T, w2_t.T                 # (in, out) layout -> kernel does x @ W + b

    ref = _reference(a, w1, b1, w2, b2)

    # f32-operand path: f32 in/out, tight check against the reference.
    params_f32 = pack_angle_resnet_params(w1, b1, w2, b2,
                                          compute_dtype=jnp.float32)
    out_f32 = jax.block_until_ready(angle_resnet_block(a, params_f32))
    assert out_f32.shape == a.shape and out_f32.dtype == a.dtype
    assert jnp.allclose(out_f32, ref, atol=1e-4, rtol=1e-4)

    # bf16-operand path (default): f32 activations read as-is, per-tile bf16
    # cast inside the kernel, bf16 output store.  Loose check.
    params_bf16 = pack_angle_resnet_params(w1, b1, w2, b2)
    out_bf16 = jax.block_until_ready(angle_resnet_block(a, params_bf16))
    assert out_bf16.shape == a.shape and out_bf16.dtype == jnp.bfloat16
    assert jnp.allclose(out_bf16.astype(jnp.float32), ref, atol=5e-2, rtol=5e-2)

    # bf16 matmuls with an f32 residual store (full-precision output path).
    out_mix = jax.block_until_ready(
        angle_resnet_block(a, params_bf16, out_dtype=jnp.float32))
    assert out_mix.shape == a.shape and out_mix.dtype == jnp.float32
    assert jnp.allclose(out_mix, ref, atol=5e-2, rtol=5e-2)

    # TODO(synk): at this toy shape (16x32, ~130 KFLOP) a fused XLA op beats a
    # Pallas call; the kernel is sized/tiled for large N where it matters.
    print("KERNEL_OK")
</pallas_src>

<mosaic_0001>
module attributes {stable_mosaic.version = 11 : i64} {
  func.func @_angle_resnet_kernel(%arg0: i32, %arg1: memref<8x128xf32, #tpu.memory_space<vmem>>, %arg2: memref<128x128xf32, #tpu.memory_space<vmem>>, %arg3: memref<1x128xf32, #tpu.memory_space<vmem>>, %arg4: memref<128x128xf32, #tpu.memory_space<vmem>>, %arg5: memref<1x128xf32, #tpu.memory_space<vmem>>, %arg6: memref<8x128xf32, #tpu.memory_space<vmem>>) attributes {dimension_semantics = [#tpu.dimension_semantics<parallel>], iteration_bounds = array<i64: 1>, scalar_prefetch = 0 : i64, scratch_operands = 0 : i64, tpu.core_type = #tpu.core_type<tc>, window_params = [{transform_indices = @transform_0, window_bounds = array<i64: 8, 128>}, {pipeline_mode = #tpu.pipeline_mode<synchronous>, transform_indices = @transform_1, window_bounds = array<i64: 128, 128>}, {pipeline_mode = #tpu.pipeline_mode<synchronous>, transform_indices = @transform_2, window_bounds = array<i64: 1, 128>}, {pipeline_mode = #tpu.pipeline_mode<synchronous>, transform_indices = @transform_3, window_bounds = array<i64: 128, 128>}, {pipeline_mode = #tpu.pipeline_mode<synchronous>, transform_indices = @transform_4, window_bounds = array<i64: 1, 128>}, {transform_indices = @transform_5, window_bounds = array<i64: 8, 128>}]} {
    %c0 = arith.constant 0 : index
    %c0_0 = arith.constant 0 : index
    %0 = vector.load %arg1[%c0, %c0_0] : memref<8x128xf32, #tpu.memory_space<vmem>>, vector<8x128xf32>
    %cst = arith.constant 0.000000e+00 : f32
    %1 = vector.broadcast %cst : f32 to vector<8x128xf32>
    %2 = arith.maximumf %0, %1 : vector<8x128xf32>
    %c0_1 = arith.constant 0 : index
    %c0_2 = arith.constant 0 : index
    %3 = vector.load %arg2[%c0_1, %c0_2] : memref<128x128xf32, #tpu.memory_space<vmem>>, vector<128x128xf32>
    %cst_3 = arith.constant dense<0.000000e+00> : vector<8x128xf32>
    %4 = tpu.matmul %2, %3, %cst_3 {dimension_numbers = #tpu.dot_dimension_numbers<[1], [0], [0], [1], [0, 0, 1, 1], [], []>} : vector<8x128xf32>, vector<128x128xf32>, vector<8x128xf32> -> vector<8x128xf32>
    %c0_4 = arith.constant 0 : index
    %c0_5 = arith.constant 0 : index
    %5 = vector.load %arg3[%c0_4, %c0_5] : memref<1x128xf32, #tpu.memory_space<vmem>>, vector<1x128xf32>
    %6 = vector.broadcast %5 : vector<1x128xf32> to vector<8x128xf32>
    %7 = arith.addf %4, %6 : vector<8x128xf32>
    %cst_6 = arith.constant 0.000000e+00 : f32
    %8 = vector.broadcast %cst_6 : f32 to vector<8x128xf32>
    %9 = arith.maximumf %7, %8 : vector<8x128xf32>
    %c0_7 = arith.constant 0 : index
    %c0_8 = arith.constant 0 : index
    %10 = vector.load %arg4[%c0_7, %c0_8] : memref<128x128xf32, #tpu.memory_space<vmem>>, vector<128x128xf32>
    %cst_9 = arith.constant dense<0.000000e+00> : vector<8x128xf32>
    %11 = tpu.matmul %9, %10, %cst_9 {dimension_numbers = #tpu.dot_dimension_numbers<[1], [0], [0], [1], [0, 0, 1, 1], [], []>} : vector<8x128xf32>, vector<128x128xf32>, vector<8x128xf32> -> vector<8x128xf32>
    %c0_10 = arith.constant 0 : index
    %c0_11 = arith.constant 0 : index
    %12 = vector.load %arg5[%c0_10, %c0_11] : memref<1x128xf32, #tpu.memory_space<vmem>>, vector<1x128xf32>
    %13 = vector.broadcast %12 : vector<1x128xf32> to vector<8x128xf32>
    %14 = arith.addf %11, %13 : vector<8x128xf32>
    %15 = arith.addf %14, %0 : vector<8x128xf32>
    %c0_12 = arith.constant 0 : index
    %c0_13 = arith.constant 0 : index
    %16 = vector.load %arg6[%c0_12, %c0_13] : memref<8x128xf32, #tpu.memory_space<vmem>>, vector<8x128xf32>
    tpu.vector_store %arg6[%c0_12, %c0_13], %15 {strides = array<i32>} : memref<8x128xf32, #tpu.memory_space<vmem>>, vector<8x128xf32>,
    return
  }
  func.func @transform_0(%arg0: i32) -> (i32, i32) {
    %c0_i32 = arith.constant 0 : i32
    %c0_i32_0 = arith.constant 0 : i32
    return %arg0, %c0_i32 : i32, i32
  }
  func.func @transform_1(%arg0: i32) -> (i32, i32) {
    %c0_i32 = arith.constant 0 : i32
    %c0_i32_0 = arith.constant 0 : i32
    %c0_i32_1 = arith.constant 0 : i32
    return %c0_i32, %c0_i32_0 : i32, i32
  }
  func.func @transform_2(%arg0: i32) -> (i32, i32) {
    %c0_i32 = arith.constant 0 : i32
    %c0_i32_0 = arith.constant 0 : i32
    %c0_i32_1 = arith.constant 0 : i32
    return %c0_i32, %c0_i32_0 : i32, i32
  }
  func.func @transform_3(%arg0: i32) -> (i32, i32) {
    %c0_i32 = arith.constant 0 : i32
    %c0_i32_0 = arith.constant 0 : i32
    %c0_i32_1 = arith.constant 0 : i32
    return %c0_i32, %c0_i32_0 : i32, i32
  }
  func.func @transform_4(%arg0: i32) -> (i32, i32) {
    %c0_i32 = arith.constant 0 : i32
    %c0_i32_0 = arith.constant 0 : i32
    %c0_i32_1 = arith.constant 0 : i32
    return %c0_i32, %c0_i32_0 : i32, i32
  }
  func.func @transform_5(%arg0: i32) -> (i32, i32) {
    %c0_i32 = arith.constant 0 : i32
    %c0_i32_0 = arith.constant 0 : i32
    return %arg0, %c0_i32 : i32, i32
  }
}

</mosaic_0001>

<llo_original>
// kernel: tpu_custom_call.1
$region0: #{tpu_custom_call.1}
  #allocation0 [shape = 'u32[]', space=smem, size = 0x4, offset = 0x4, fixed_abs, tag = 'smem constant byte address 0x4 - core index']
  #allocation1 [shape = 'u32[72,128]{1,0:T(1,128)}', space=vmem, size = 0x9000, scoped, tag = 'internal scratch']
  %s0 = inlined_call_operand.hbm [shape: f32[8,128], index: 0, kind: input, shape index: {}]
  %s1 = inlined_call_operand.hbm [shape: f32[128,128], index: 1, kind: input, shape index: {}]
  %s2 = inlined_call_operand.vmem [shape: f32[1,128], index: 2, kind: input, shape index: {}]
  %s3 = inlined_call_operand.hbm [shape: f32[128,128], index: 3, kind: input, shape index: {}]
  %s4 = inlined_call_operand.vmem [shape: f32[1,128], index: 4, kind: input, shape index: {}]
  %s5 = inlined_call_operand.hbm [shape: f32[8,128], index: 5, kind: output, shape index: {}]
  %s6 = sld [smem:[#allocation0]]
  $region42: #{tpu_custom_call.1} parent=0
    _
  %s8 = ssub.s32 1, %s6
  %s9 = scalar_select 0, %s8, %s6
  $region1: #{tpu_custom_call.1} parent=0
    #allocation2 [shape = 'u8[4096]{0}', space=vmem, size = 0x1000, scoped, tag = 'input window, operand 0, single buffered']
    #allocation3 [shape = 's32[1]{0}', space=sflag, size = 0x4, scoped, tag = 'scoped memory for tpu_custom_call.1']
    #allocation4 [shape = 's32[1]{0}', space=sflag, size = 0x4, scoped, tag = 'scoped memory for tpu_custom_call.1']
    #allocation5 [shape = 'u8[65536]{0}', space=vmem, size = 0x10000, scoped, tag = 'input window, operand 1, single buffered']
    #allocation6 [shape = 's32[1]{0}', space=sflag, size = 0x4, scoped, tag = 'scoped memory for tpu_custom_call.1']
    #allocation7 [shape = 'u8[65536]{0}', space=vmem, size = 0x10000, scoped, tag = 'input window, operand 3, single buffered']
    #allocation8 [shape = 'u8[4096]{0}', space=vmem, size = 0x1000, scoped, tag = 'output window, operand 0, single buffered']
    %10 = vsyncpa [#allocation3], 0
    %11 = vsyncpa [#allocation6], 0
    %12 = vsyncpa [#allocation4], 0
    // Predicated region
    $region2: #{tpu_custom_call.1} parent=1 // pred_check
      _
    $region3: #{tpu_custom_call.1} parent=1 // pred_check_branch
      %14 = sbr.rel (0) target = $region5
    $region4: #{tpu_custom_call.1} parent=1 // pred_region
      %16 = vsyncadd [#allocation3], 0
      %s18 = sshll.u32 %s0, 4
      %s19 = int_to_ptr.hbm [resolvable:$true] %s18
      %s20 = sshll.u32 [#allocation2], 4
      %s21 = int_to_ptr.vmem [resolvable:$true] %s20
      %23 = dma.hbm_to_vmem [thread:$0]  %s19, 128, %s21, [#allocation3]
    $region5: #{tpu_custom_call.1} parent=1 // pred_fallthru
      _
    // Predicated region
    $region6: #{tpu_custom_call.1} parent=1 // pred_check
      _
    $region7: #{tpu_custom_call.1} parent=1 // pred_check_branch
      %25 = sbr.rel (0) target = $region9
    $region8: #{tpu_custom_call.1} parent=1 // pred_region
      %27 = vsyncadd [#allocation6], 0
      %s28 = sshll.u32 %s1, 4
      %s29 = int_to_ptr.hbm [resolvable:$true] %s28
      %s30 = sshll.u32 [#allocation5], 4
      %s31 = int_to_ptr.vmem [resolvable:$true] %s30
      %36 = dma.hbm_to_vmem [thread:$0]  %s29, 2048, %s31, [#allocation6], 128, 128, 8
    $region9: #{tpu_custom_call.1} parent=1 // pred_fallthru
      _
    // Predicated region
    $region10: #{tpu_custom_call.1} parent=1 // pred_check
      _
    $region11: #{tpu_custom_call.1} parent=1 // pred_check_branch
      %38 = sbr.rel (0) target = $region13
    $region12: #{tpu_custom_call.1} parent=1 // pred_region
      _
    $region13: #{tpu_custom_call.1} parent=1 // pred_fallthru
      _
    // Predicated region
    $region14: #{tpu_custom_call.1} parent=1 // pred_check
      _
    $region15: #{tpu_custom_call.1} parent=1 // pred_check_branch
      %40 = sbr.rel (0) target = $region17
    $region16: #{tpu_custom_call.1} parent=1 // pred_region
      %42 = vsyncadd [#allocation6], 0
      %s43 = sshll.u32 %s3, 4
      %s44 = int_to_ptr.hbm [resolvable:$true] %s43
      %s45 = sshll.u32 [#allocation7], 4
      %s46 = int_to_ptr.vmem [resolvable:$true] %s45
      %51 = dma.hbm_to_vmem [thread:$0]  %s44, 2048, %s46, [#allocation6], 128, 128, 8
    $region17: #{tpu_custom_call.1} parent=1 // pred_fallthru
      _
    // Predicated region
    $region18: #{tpu_custom_call.1} parent=1 // pred_check
      _
    $region19: #{tpu_custom_call.1} parent=1 // pred_check_branch
      %53 = sbr.rel (0) target = $region21
    $region20: #{tpu_custom_call.1} parent=1 // pred_region
      _
    $region21: #{tpu_custom_call.1} parent=1 // pred_fallthru
      _
    // Predicated region
    $region22: #{tpu_custom_call.1} parent=1 // pred_check
      _
    $region23: #{tpu_custom_call.1} parent=1 // pred_check_branch
      %55 = sbr.rel (0) target = $region25
    $region24: #{tpu_custom_call.1} parent=1 // pred_region
      %57 = dma.done [#allocation3], 128
    $region25: #{tpu_custom_call.1} parent=1 // pred_fallthru
      _
    // Predicated region
    $region26: #{tpu_custom_call.1} parent=1 // pred_check
      _
    $region27: #{tpu_custom_call.1} parent=1 // pred_check_branch
      %59 = sbr.rel (0) target = $region29
    $region28: #{tpu_custom_call.1} parent=1 // pred_region
      %61 = dma.done [#allocation6], 2048
    $region29: #{tpu_custom_call.1} parent=1 // pred_fallthru
      _
    // Predicated region
    $region30: #{tpu_custom_call.1} parent=1 // pred_check
      _
    $region31: #{tpu_custom_call.1} parent=1 // pred_check_branch
      %63 = sbr.rel (0) target = $region33
    $region32: #{tpu_custom_call.1} parent=1 // pred_region
      %65 = dma.done [#allocation6], 2048
    $region33: #{tpu_custom_call.1} parent=1 // pred_fallthru
      _
    %v66 = vld [vmem:[#allocation2] sm:$0xff]
    %v67 = vmax.f32 %v66, 0.0
    %v68 = vld [vmem:[#allocation5] sm:$0xff]
    %v69 = vld [vmem:[#allocation5 + $0x8] sm:$0xff]
    %v70 = vld [vmem:[#allocation5 + $0x10] sm:$0xff]
    %v71 = vld [vmem:[#allocation5 + $0x18] sm:$0xff]
    %v72 = vld [vmem:[#allocation5 + $0x20] sm:$0xff]
    %v73 = vld [vmem:[#allocation5 + $0x28] sm:$0xff]
    %v74 = vld [vmem:[#allocation5 + $0x30] sm:$0xff]
    %v75 = vld [vmem:[#allocation5 + $0x38] sm:$0xff]
    %v76 = vld [vmem:[#allocation5 + $0x40] sm:$0xff]
    %v77 = vld [vmem:[#allocation5 + $0x48] sm:$0xff]
    %v78 = vld [vmem:[#allocation5 + $0x50] sm:$0xff]
    %v79 = vld [vmem:[#allocation5 + $0x58] sm:$0xff]
    %v80 = vld [vmem:[#allocation5 + $0x60] sm:$0xff]
    %v81 = vld [vmem:[#allocation5 + $0x68] sm:$0xff]
    %v82 = vld [vmem:[#allocation5 + $0x70] sm:$0xff]
    %v83 = vld [vmem:[#allocation5 + $0x78] sm:$0xff]
    %v84 = vld [vmem:[%s2] sm:$0x1]
    %v86 = vperm.slane %v84, 0
    %88 = vmatpush.msra.mxu0 %v83
    %89 = vmatpush.msra.mxu0 %v82
    %90 = vmatpush.msra.mxu0 %v81
    %91 = vmatpush.msra.mxu0 %v80
    %92 = vmatpush.msra.mxu0 %v79
    %93 = vmatpush.msra.mxu0 %v78
    %94 = vmatpush.msra.mxu0 %v77
    %95 = vmatpush.msra.mxu0 %v76
    %96 = vmatpush.msra.mxu0 %v75
    %97 = vmatpush.msra.mxu0 %v74
    %98 = vmatpush.msra.mxu0 %v73
    %99 = vmatpush.msra.mxu0 %v72
    %100 = vmatpush.msra.mxu0 %v71
    %101 = vmatpush.msra.mxu0 %v70
    %102 = vmatpush.msra.mxu0 %v69
    %103 = vmatpush.msra.mxu0 %v68
    %104 = vmatmul.f32.gmra.mxu0 %v67
    %v105 = vpop.f32.mrf.mxu0
    %v106 = vadd.f32 %v86, %v105
    %107 = vdwg.mxu0
    %v108 = vmax.f32 %v106, 0.0
    %v109 = vld [vmem:[#allocation7] sm:$0xff]
    %v110 = vld [vmem:[#allocation7 + $0x8] sm:$0xff]
    %v111 = vld [vmem:[#allocation7 + $0x10] sm:$0xff]
    %v112 = vld [vmem:[#allocation7 + $0x18] sm:$0xff]
    %v113 = vld [vmem:[#allocation7 + $0x20] sm:$0xff]
    %v114 = vld [vmem:[#allocation7 + $0x28] sm:$0xff]
    %v115 = vld [vmem:[#allocation7 + $0x30] sm:$0xff]
    %v116 = vld [vmem:[#allocation7 + $0x38] sm:$0xff]
    %v117 = vld [vmem:[#allocation7 + $0x40] sm:$0xff]
    %v118 = vld [vmem:[#allocation7 + $0x48] sm:$0xff]
    %v119 = vld [vmem:[#allocation7 + $0x50] sm:$0xff]
    %v120 = vld [vmem:[#allocation7 + $0x58] sm:$0xff]
    %v121 = vld [vmem:[#allocation7 + $0x60] sm:$0xff]
    %v122 = vld [vmem:[#allocation7 + $0x68] sm:$0xff]
    %v123 = vld [vmem:[#allocation7 + $0x70] sm:$0xff]
    %v124 = vld [vmem:[#allocation7 + $0x78] sm:$0xff]
    %v125 = vld [vmem:[%s4] sm:$0x1]
    %v127 = vperm.slane %v125, 0
    %129 = vmatpush.msra.mxu0 %v124
    %130 = vmatpush.msra.mxu0 %v123
    %131 = vmatpush.msra.mxu0 %v122
    %132 = vmatpush.msra.mxu0 %v121
    %133 = vmatpush.msra.mxu0 %v120
    %134 = vmatpush.msra.mxu0 %v119
    %135 = vmatpush.msra.mxu0 %v118
    %136 = vmatpush.msra.mxu0 %v117
    %137 = vmatpush.msra.mxu0 %v116
    %138 = vmatpush.msra.mxu0 %v115
    %139 = vmatpush.msra.mxu0 %v114
    %140 = vmatpush.msra.mxu0 %v113
    %141 = vmatpush.msra.mxu0 %v112
    %142 = vmatpush.msra.mxu0 %v111
    %143 = vmatpush.msra.mxu0 %v110
    %144 = vmatpush.msra.mxu0 %v109
    %145 = vmatmul.f32.gmra.mxu0 %v108
    %v146 = vpop.f32.mrf.mxu0
    %v147 = vadd.f32 %v127, %v146
    %148 = vdwg.mxu0
    %v149 = vadd.f32 %v147, %v66
    %150 = vst [vmem:[#allocation8] sm:$0xff] %v149
    // Predicated region
    $region34: #{tpu_custom_call.1} parent=1 // pred_check
      _
    $region35: #{tpu_custom_call.1} parent=1 // pred_check_branch
      %152 = sbr.rel (0) target = $region37
    $region36: #{tpu_custom_call.1} parent=1 // pred_region
      %154 = vsyncadd [#allocation4], 0
      %s156 = sshll.u32 [#allocation8], 4
      %s157 = int_to_ptr.vmem [resolvable:$true] %s156
      %s158 = sshll.u32 %s5, 4
      %s159 = int_to_ptr.hbm [resolvable:$true] %s158
      %161 = dma.vmem_to_hbm [thread:$0]  %s157, 128, %s159, [#allocation4]
    $region37: #{tpu_custom_call.1} parent=1 // pred_fallthru
      _
    // Predicated region
    $region38: #{tpu_custom_call.1} parent=1 // pred_check
      _
    $region39: #{tpu_custom_call.1} parent=1 // pred_check_branch
      %163 = sbr.rel (0) target = $region41
    $region40: #{tpu_custom_call.1} parent=1 // pred_region
      %165 = dma.done [#allocation4], 128
    $region41: #{tpu_custom_call.1} parent=1 // pred_fallthru
      _
    %166 = vsyncpa [#allocation3], 1
    %167 = vsyncpa [#allocation6], 1
    %168 = vsyncpa [#allocation4], 1

</llo_original>
